<compile_context>
chip_gen: v5e
topology: v5e:2x2
jax: 0.10.0
libtpu: 0.0.40
codegen_flags: <defaults>
</compile_context>

<pallas_src>
import jax
import jax.numpy as jnp
from jax.experimental import pallas as pl
from jax.experimental.pallas import tpu as pltpu


def _round_up(x, m):
    return (x + m - 1) // m * m


def _gaussian_reparam_kernel(mu_ref, logvar_ref, eps_ref, z_ref):
    """z = mu + eps * exp(0.5 * log_var); compute in f32, store in z dtype."""
    mu = mu_ref[...].astype(jnp.float32)
    log_var = logvar_ref[...].astype(jnp.float32)
    eps = eps_ref[...].astype(jnp.float32)
    z = mu + eps * jnp.exp(0.5 * log_var)
    z_ref[...] = z.astype(z_ref.dtype)


def _choose_lane_width(total):
    """Widest lane-dense slab width (multiple of 128) that divides total."""
    for w in (1024, 512, 256, 128):
        if total % w == 0:
            return w
    return None


def latent_generator_forward(
    dist_params,
    key,
    distribution="gaussian",
    *,
    return_eps=False,
    vmem_budget_bytes=16 * 1024 * 1024,  # conservative: fits v5e's scoped default
    max_block_elements=128 * 1024,       # ~512 rows @ d=128: already ~HBM roofline
):
    if distribution != "gaussian":
        raise NotImplementedError("Only the 'gaussian' distribution is implemented")
    mu, log_var = dist_params
    assert mu.shape == log_var.shape and mu.ndim == 2
    n, d = mu.shape
    out_dtype = mu.dtype
    total = n * d

    # eps ~ N(0,1) via jax.random (portable + reproducible against the key);
    # generated in storage dtype so the kernel's HBM traffic stays symmetric.
    eps = jax.random.normal(key, (n, d), dtype=out_dtype)

    # Elementwise op: present a lane-dense slab (last dim = big multiple of 128)
    # whenever n*d allows; otherwise keep (n, d) with a full-d block.
    w = _choose_lane_width(total)
    if w is not None:
        rows = total // w
        mu2, lv2, eps2 = (a.reshape(rows, w) for a in (mu, log_var, eps))
    else:
        rows, w = n, d
        mu2, lv2, eps2 = mu, log_var, eps
        # TODO(synk): pad non-128-multiple latent dims to avoid masked stores.

    itemsize = jnp.dtype(out_dtype).itemsize
    # Per-element VMEM: double-buffered streams (mu, log_var, eps in; z out)
    # plus ~4 full-tile f32 temporaries (upcasts / std / pre-cast z).
    bytes_per_elem = 2 * 4 * itemsize + 4 * 4

    if rows < 16:
        tm = rows  # single whole-array block
    else:
        tm_fit = max(8, (vmem_budget_bytes // (bytes_per_elem * w)) // 8 * 8)
        tm_cap = max(8, (max_block_elements // w) // 8 * 8)
        tm = min(tm_fit, tm_cap, _round_up(rows, 8))
        # Guarantee >= 2 grid steps so v7x's 2 TensorCores both get work.
        tm = min(tm, _round_up(pl.cdiv(rows, 2), 8))
        tm = max(tm, 8)

    grid = (pl.cdiv(rows, tm),)
    spec = pl.BlockSpec((tm, w), lambda i: (i, 0))

    footprint = tm * w * bytes_per_elem
    vmem_limit = min(max(footprint + (2 << 20), 4 << 20), 64 << 20)

    cost = pl.CostEstimate(
        flops=3 * total,                       # mul, mul, add per element
        transcendentals=total,                 # one exp per element
        bytes_accessed=total * itemsize * 4,   # 3 reads + 1 write
    )

    z = pl.pallas_call(
        _gaussian_reparam_kernel,
        out_shape=jax.ShapeDtypeStruct((rows, w), out_dtype),
        grid=grid,
        in_specs=[spec, spec, spec],
        out_specs=spec,
        compiler_params=pltpu.CompilerParams(
            dimension_semantics=("parallel",),
            vmem_limit_bytes=vmem_limit,
        ),
        cost_estimate=cost,
    )(mu2, lv2, eps2)

    z = z.reshape(n, d)
    return (z, eps) if return_eps else z


if __name__ == "__main__":
    key = jax.random.PRNGKey(0)
    k_mu, k_lv, k_eps, k_mu2, k_lv2, k_eps2 = jax.random.split(key, 6)

    # Module-sized demo: 16 latent codes of dim 128 -> single lane-dense block.
    NUM_LATENTS, LATENT_DIM = 16, 128
    mu = jax.random.normal(k_mu, (NUM_LATENTS, LATENT_DIM), dtype=jnp.float32)
    log_var = 0.1 * jax.random.normal(
        k_lv, (NUM_LATENTS, LATENT_DIM), dtype=jnp.float32
    )

    z, eps = latent_generator_forward((mu, log_var), k_eps, return_eps=True)
    z = jax.block_until_ready(z)

    # Pure-JAX reference of the same forward pass with the same eps draw.
    ref = mu + eps.astype(jnp.float32) * jnp.exp(0.5 * log_var)
    assert z.shape == (NUM_LATENTS, LATENT_DIM) and z.dtype == jnp.float32
    assert jnp.allclose(z, ref, atol=1e-5, rtol=1e-5)

    # Second check: non-128 latent dim + multi-step grid (exercises the
    # lane-dense flatten path and a partial last row block).
    N2, D2 = 200, 96
    mu2 = jax.random.normal(k_mu2, (N2, D2), dtype=jnp.float32)
    lv2 = 0.1 * jax.random.normal(k_lv2, (N2, D2), dtype=jnp.float32)
    z2, eps2 = latent_generator_forward(
        (mu2, lv2), k_eps2, return_eps=True, max_block_elements=64 * 128
    )
    z2 = jax.block_until_ready(z2)
    ref2 = mu2 + eps2.astype(jnp.float32) * jnp.exp(0.5 * lv2)
    assert z2.shape == (N2, D2)
    assert jnp.allclose(z2, ref2, atol=1e-5, rtol=1e-5)
    # eps should look standard normal (loose bounds; 19200 samples).
    assert abs(float(eps2.mean())) < 0.2
    assert abs(float(eps2.std()) - 1.0) < 0.2

    print("KERNEL_OK")
</pallas_src>

<mosaic_0001>
module attributes {stable_mosaic.version = 11 : i64} {
  func.func @_gaussian_reparam_kernel(%arg0: i32, %arg1: memref<2x1024xf32, #tpu.memory_space<vmem>>, %arg2: memref<2x1024xf32, #tpu.memory_space<vmem>>, %arg3: memref<2x1024xf32, #tpu.memory_space<vmem>>, %arg4: memref<2x1024xf32, #tpu.memory_space<vmem>>) attributes {dimension_semantics = [#tpu.dimension_semantics<parallel>], iteration_bounds = array<i64: 1>, scalar_prefetch = 0 : i64, scratch_operands = 0 : i64, tpu.core_type = #tpu.core_type<tc>, window_params = [{transform_indices = @transform_0, window_bounds = array<i64: 2, 1024>}, {transform_indices = @transform_1, window_bounds = array<i64: 2, 1024>}, {transform_indices = @transform_2, window_bounds = array<i64: 2, 1024>}, {transform_indices = @transform_3, window_bounds = array<i64: 2, 1024>}]} {
    %c0 = arith.constant 0 : index
    %c0_0 = arith.constant 0 : index
    %0 = vector.load %arg1[%c0, %c0_0] : memref<2x1024xf32, #tpu.memory_space<vmem>>, vector<2x1024xf32>
    %c0_1 = arith.constant 0 : index
    %c0_2 = arith.constant 0 : index
    %1 = vector.load %arg2[%c0_1, %c0_2] : memref<2x1024xf32, #tpu.memory_space<vmem>>, vector<2x1024xf32>
    %c0_3 = arith.constant 0 : index
    %c0_4 = arith.constant 0 : index
    %2 = vector.load %arg3[%c0_3, %c0_4] : memref<2x1024xf32, #tpu.memory_space<vmem>>, vector<2x1024xf32>
    %cst = arith.constant 5.000000e-01 : f32
    %3 = vector.broadcast %cst : f32 to vector<2x1024xf32>
    %4 = arith.mulf %3, %1 : vector<2x1024xf32>
    %5 = math.exp %4 : vector<2x1024xf32>
    %6 = arith.mulf %2, %5 : vector<2x1024xf32>
    %7 = arith.addf %0, %6 : vector<2x1024xf32>
    %c0_5 = arith.constant 0 : index
    %c0_6 = arith.constant 0 : index
    %8 = vector.load %arg4[%c0_5, %c0_6] : memref<2x1024xf32, #tpu.memory_space<vmem>>, vector<2x1024xf32>
    tpu.vector_store %arg4[%c0_5, %c0_6], %7 {strides = array<i32>} : memref<2x1024xf32, #tpu.memory_space<vmem>>, vector<2x1024xf32>,
    return
  }
  func.func @transform_0(%arg0: i32) -> (i32, i32) {
    %c0_i32 = arith.constant 0 : i32
    %c0_i32_0 = arith.constant 0 : i32
    return %arg0, %c0_i32 : i32, i32
  }
  func.func @transform_1(%arg0: i32) -> (i32, i32) {
    %c0_i32 = arith.constant 0 : i32
    %c0_i32_0 = arith.constant 0 : i32
    return %arg0, %c0_i32 : i32, i32
  }
  func.func @transform_2(%arg0: i32) -> (i32, i32) {
    %c0_i32 = arith.constant 0 : i32
    %c0_i32_0 = arith.constant 0 : i32
    return %arg0, %c0_i32 : i32, i32
  }
  func.func @transform_3(%arg0: i32) -> (i32, i32) {
    %c0_i32 = arith.constant 0 : i32
    %c0_i32_0 = arith.constant 0 : i32
    return %arg0, %c0_i32 : i32, i32
  }
}

</mosaic_0001>

<llo_original>
// kernel: tpu_custom_call.1
$region0: #{tpu_custom_call.1}
  #allocation0 [shape = 'u32[]', space=smem, size = 0x4, offset = 0x4, fixed_abs, tag = 'smem constant byte address 0x4 - core index']
  #allocation1 [shape = 'u32[72,128]{1,0:T(1,128)}', space=vmem, size = 0x9000, scoped, tag = 'internal scratch']
  %s0 = inlined_call_operand.hbm [shape: f32[2,1024], index: 0, kind: input, shape index: {}]
  %s1 = inlined_call_operand.hbm [shape: f32[2,1024], index: 1, kind: input, shape index: {}]
  %s2 = inlined_call_operand.hbm [shape: f32[2,1024], index: 2, kind: input, shape index: {}]
  %s3 = inlined_call_operand.hbm [shape: f32[2,1024], index: 3, kind: output, shape index: {}]
  %s4 = sld [smem:[#allocation0]]
  $region34: #{tpu_custom_call.1} parent=0
    _
  %s6 = ssub.s32 1, %s4
  %s7 = scalar_select 0, %s6, %s4
  $region1: #{tpu_custom_call.1} parent=0
    #allocation2 [shape = 'u8[8192]{0}', space=vmem, size = 0x2000, scoped, tag = 'input window, operand 0, single buffered']
    #allocation3 [shape = 's32[1]{0}', space=sflag, size = 0x4, scoped, tag = 'scoped memory for tpu_custom_call.1']
    #allocation4 [shape = 's32[1]{0}', space=sflag, size = 0x4, scoped, tag = 'scoped memory for tpu_custom_call.1']
    #allocation5 [shape = 'u8[8192]{0}', space=vmem, size = 0x2000, scoped, tag = 'input window, operand 1, single buffered']
    #allocation6 [shape = 's32[1]{0}', space=sflag, size = 0x4, scoped, tag = 'scoped memory for tpu_custom_call.1']
    #allocation7 [shape = 'u8[8192]{0}', space=vmem, size = 0x2000, scoped, tag = 'input window, operand 2, single buffered']
    #allocation8 [shape = 'u8[8192]{0}', space=vmem, size = 0x2000, scoped, tag = 'output window, operand 0, single buffered']
    %8 = vsyncpa [#allocation3], 0
    %9 = vsyncpa [#allocation6], 0
    %10 = vsyncpa [#allocation4], 0
    // Predicated region
    $region2: #{tpu_custom_call.1} parent=1 // pred_check
      _
    $region3: #{tpu_custom_call.1} parent=1 // pred_check_branch
      %12 = sbr.rel (0) target = $region5
    $region4: #{tpu_custom_call.1} parent=1 // pred_region
      %14 = vsyncadd [#allocation3], 0
      %s16 = sshll.u32 %s0, 4
      %s17 = int_to_ptr.hbm [resolvable:$true] %s16
      %s18 = sshll.u32 [#allocation2], 4
      %s19 = int_to_ptr.vmem [resolvable:$true] %s18
      %21 = dma.hbm_to_vmem [thread:$0]  %s17, 256, %s19, [#allocation3]
    $region5: #{tpu_custom_call.1} parent=1 // pred_fallthru
      _
    // Predicated region
    $region6: #{tpu_custom_call.1} parent=1 // pred_check
      _
    $region7: #{tpu_custom_call.1} parent=1 // pred_check_branch
      %23 = sbr.rel (0) target = $region9
    $region8: #{tpu_custom_call.1} parent=1 // pred_region
      %25 = vsyncadd [#allocation6], 0
      %s27 = sshll.u32 %s1, 4
      %s28 = int_to_ptr.hbm [resolvable:$true] %s27
      %s29 = sshll.u32 [#allocation5], 4
      %s30 = int_to_ptr.vmem [resolvable:$true] %s29
      %32 = dma.hbm_to_vmem [thread:$0]  %s28, 256, %s30, [#allocation6]
    $region9: #{tpu_custom_call.1} parent=1 // pred_fallthru
      _
    // Predicated region
    $region10: #{tpu_custom_call.1} parent=1 // pred_check
      _
    $region11: #{tpu_custom_call.1} parent=1 // pred_check_branch
      %34 = sbr.rel (0) target = $region13
    $region12: #{tpu_custom_call.1} parent=1 // pred_region
      %36 = vsyncadd [#allocation6], 0
      %s38 = sshll.u32 %s2, 4
      %s39 = int_to_ptr.hbm [resolvable:$true] %s38
      %s40 = sshll.u32 [#allocation7], 4
      %s41 = int_to_ptr.vmem [resolvable:$true] %s40
      %43 = dma.hbm_to_vmem [thread:$0]  %s39, 256, %s41, [#allocation6]
    $region13: #{tpu_custom_call.1} parent=1 // pred_fallthru
      _
    // Predicated region
    $region14: #{tpu_custom_call.1} parent=1 // pred_check
      _
    $region15: #{tpu_custom_call.1} parent=1 // pred_check_branch
      %45 = sbr.rel (0) target = $region17
    $region16: #{tpu_custom_call.1} parent=1 // pred_region
      %47 = dma.done [#allocation3], 256
    $region17: #{tpu_custom_call.1} parent=1 // pred_fallthru
      _
    // Predicated region
    $region18: #{tpu_custom_call.1} parent=1 // pred_check
      _
    $region19: #{tpu_custom_call.1} parent=1 // pred_check_branch
      %49 = sbr.rel (0) target = $region21
    $region20: #{tpu_custom_call.1} parent=1 // pred_region
      %51 = dma.done [#allocation6], 256
    $region21: #{tpu_custom_call.1} parent=1 // pred_fallthru
      _
    // Predicated region
    $region22: #{tpu_custom_call.1} parent=1 // pred_check
      _
    $region23: #{tpu_custom_call.1} parent=1 // pred_check_branch
      %53 = sbr.rel (0) target = $region25
    $region24: #{tpu_custom_call.1} parent=1 // pred_region
      %55 = dma.done [#allocation6], 256
    $region25: #{tpu_custom_call.1} parent=1 // pred_fallthru
      _
    %v56 = vld [vmem:[#allocation2] sm:$0xff]
    %v57 = vld [vmem:[#allocation2 + $0x8] sm:$0xff]
    %v58 = vld [vmem:[#allocation5] sm:$0xff]
    %v59 = vld [vmem:[#allocation5 + $0x8] sm:$0xff]
    %v60 = vld [vmem:[#allocation7] sm:$0xff]
    %v61 = vld [vmem:[#allocation7 + $0x8] sm:$0xff]
    %v62 = vmul.f32 %v58, 0.5
    %v63 = vmul.f32 %v59, 0.5
    %v64 = vmul.f32 %v62, 1.442695
    %v65 = vpow.pop %v64
    %v66 = vmul.f32 %v63, 1.442695
    %v67 = vpow.pop %v66
    %v68 = vmul.f32 %v60, %v65
    %v69 = vmul.f32 %v61, %v67
    %v70 = vadd.f32 %v56, %v68
    %v71 = vadd.f32 %v57, %v69
    %72 = vst [vmem:[#allocation8] sm:$0xff] %v70
    %73 = vst [vmem:[#allocation8 + $0x8] sm:$0xff] %v71
    // Predicated region
    $region26: #{tpu_custom_call.1} parent=1 // pred_check
      _
    $region27: #{tpu_custom_call.1} parent=1 // pred_check_branch
      %75 = sbr.rel (0) target = $region29
    $region28: #{tpu_custom_call.1} parent=1 // pred_region
      %77 = vsyncadd [#allocation4], 0
      %s79 = sshll.u32 [#allocation8], 4
      %s80 = int_to_ptr.vmem [resolvable:$true] %s79
      %s81 = sshll.u32 %s3, 4
      %s82 = int_to_ptr.hbm [resolvable:$true] %s81
      %84 = dma.vmem_to_hbm [thread:$0]  %s80, 256, %s82, [#allocation4]
    $region29: #{tpu_custom_call.1} parent=1 // pred_fallthru
      _
    // Predicated region
    $region30: #{tpu_custom_call.1} parent=1 // pred_check
      _
    $region31: #{tpu_custom_call.1} parent=1 // pred_check_branch
      %86 = sbr.rel (0) target = $region33
    $region32: #{tpu_custom_call.1} parent=1 // pred_region
      %88 = dma.done [#allocation4], 256
    $region33: #{tpu_custom_call.1} parent=1 // pred_fallthru
      _
    %89 = vsyncpa [#allocation3], 1
    %90 = vsyncpa [#allocation6], 1
    %91 = vsyncpa [#allocation4], 1

</llo_original>
